<compile_context>
chip_gen: v6e
topology: v6e:2x2x1
jax: 0.10.0
libtpu: 0.0.40
codegen_flags: <defaults>
</compile_context>

<pallas_src>
import functools

import jax
import jax.numpy as jnp
from jax.experimental import pallas as pl
from jax.experimental.pallas import tpu as pltpu


_BLOCK_BYTES = 2 * 1024 * 1024        # per-input-block budget (padded, f32-equiv)
_VMEM_LIMIT_BYTES = 48 * 1024 * 1024  # scoped VMEM; safe on v5e/v6e/v7x


def _round_up(x: int, m: int) -> int:
    return ((x + m - 1) // m) * m


def _num_tensorcores() -> int:
    """Best-effort TensorCore count of the default device (1 on v5e/v6e)."""
    try:
        dev = jax.devices()[0]
        for attr in ("num_cores", "core_count"):
            v = getattr(dev, attr, None)
            if isinstance(v, int) and v > 0:
                return max(1, min(int(v), 2))
    except Exception:
        pass
    return 1


def _rwmse_kernel(*refs, tiles_per_slice, packed_rows, tile_rows, acc_rows,
                  inv_batch, use_matmul, needs_mask):
    """One grid step: a (tile_rows, packed_D) slab of pred/target."""
    if use_matmul:
        ones_ref, pred_ref, tgt_ref, out_ref, acc_ref = refs
    else:
        pred_ref, tgt_ref, out_ref, acc_ref = refs

    i = pl.program_id(1)

    @pl.when(i == 0)
    def _():
        acc_ref[...] = jnp.zeros_like(acc_ref)

    t = tgt_ref[...].astype(jnp.float32)
    p = pred_ref[...].astype(jnp.float32)

    # Stabilize with the packed-row max: one constant per 128-lane row, hence
    # uniform within every D-lane segment -> per-segment softmax unchanged.
    # TODO(synk): per-segment max if packed rows can mix extreme magnitudes
    # (row-wide shift could underflow an entire low-magnitude segment).
    m = jnp.max(t, axis=-1, keepdims=True)
    e = jnp.exp(t - m)

    if use_matmul:
        # Segmented exp-sum via block-diagonal ones matmul on the idle MXU;
        # the result is already broadcast across each D-lane segment.
        denom = jnp.dot(e, ones_ref[...], preferred_element_type=jnp.float32)
    else:
        denom = jnp.sum(e, axis=-1, keepdims=True)

    diff = p - t
    wse = (e * (diff * diff)) / denom          # exact divide (no approx recip)

    if needs_mask:
        # Zero rows past the true row count: ragged final tile and any
        # clamped/duplicated surplus step of the megacore split.
        row_start = (pl.program_id(0) * tiles_per_slice + i) * tile_rows
        rid = jax.lax.broadcasted_iota(jnp.int32, wse.shape, 0) + row_start
        wse = jnp.where(rid < packed_rows, wse, 0.0)

    # Fold onto a wide accumulator: tile_rows // acc_rows dependent adds over
    # (acc_rows, packed_D) slabs -> short chain, plenty of VALU ILP.
    r, d = wse.shape
    acc_ref[...] += jnp.sum(wse.reshape(r // acc_rows, acc_rows, d), axis=0)

    @pl.when(i == pl.num_programs(1) - 1)
    def _():
        out_ref[0, 0] = jnp.sum(acc_ref[...]) * inv_batch


def rate_weighted_mse(pred: jax.Array, target: jax.Array, *,
                      block_bytes: int = _BLOCK_BYTES) -> jax.Array:
    """Pallas implementation of RateWeightedMSE.forward."""
    assert pred.shape == target.shape
    assert pred.ndim == 3
    T, B, D = pred.shape
    rows = T * B

    # --- Lane packing: k logical rows per 128-lane vreg row (free reshape). ---
    k = 1
    if D < 128:
        k = 128 // D
        while k > 1 and rows % k != 0:
            k -= 1
    packed_D = k * D
    packed_rows = rows // k
    use_matmul = k > 1

    pred2d = pred.reshape(packed_rows, packed_D)
    tgt2d = target.reshape(packed_rows, packed_D)

    # --- Tile sizing with the *padded* lane width (honest VMEM accounting). ---
    padded_lane_bytes = _round_up(packed_D, 128) * 4          # f32-equivalent
    max_tile_rows = max(8, (block_bytes // padded_lane_bytes) // 8 * 8)
    tile_rows = min(max_tile_rows, _round_up(packed_rows, 8))
    acc_rows = 8
    for cand in (128, 64, 32, 16, 8):
        if tile_rows % cand == 0:
            acc_rows = cand
            break

    total_tiles = -(-packed_rows // tile_rows)                # ceil div
    num_slices = max(1, min(_num_tensorcores(), total_tiles))
    tiles_per_slice = -(-total_tiles // num_slices)
    needs_mask = packed_rows != num_slices * tiles_per_slice * tile_rows

    def row_block(s, i):
        idx = s * tiles_per_slice + i
        # Clamp so a surplus step of the last slice never addresses a fully
        # out-of-range block; its contribution is masked to zero in-kernel.
        return (jnp.minimum(idx, total_tiles - 1), 0)

    operands = []
    in_specs = []
    if use_matmul:
        seg = jnp.arange(packed_D, dtype=jnp.int32) // D
        ones_bd = (seg[:, None] == seg[None, :]).astype(jnp.float32)
        operands.append(ones_bd)
        # Constant block index -> fetched once, stays resident across steps.
        in_specs.append(pl.BlockSpec((packed_D, packed_D), lambda s, i: (0, 0)))
    operands += [pred2d, tgt2d]
    in_specs += [
        pl.BlockSpec((tile_rows, packed_D), row_block),
        pl.BlockSpec((tile_rows, packed_D), row_block),
    ]

    kernel = functools.partial(
        _rwmse_kernel,
        tiles_per_slice=tiles_per_slice,
        packed_rows=packed_rows,
        tile_rows=tile_rows,
        acc_rows=acc_rows,
        inv_batch=float(1.0 / B),
        use_matmul=use_matmul,
        needs_mask=needs_mask,
    )

    itemsize = jnp.dtype(pred.dtype).itemsize
    cost = pl.CostEstimate(
        flops=10 * rows * D,
        transcendentals=rows * D,
        bytes_accessed=2 * rows * D * itemsize + num_slices * 4,
    )

    partials = pl.pallas_call(
        kernel,
        out_shape=jax.ShapeDtypeStruct((num_slices, 1), jnp.float32),
        grid_spec=pltpu.PrefetchScalarGridSpec(
            num_scalar_prefetch=0,
            grid=(num_slices, tiles_per_slice),
            in_specs=in_specs,
            out_specs=pl.BlockSpec((1, 1), lambda s, i: (s, 0),
                                   memory_space=pltpu.SMEM),
            scratch_shapes=[pltpu.VMEM((acc_rows, packed_D), jnp.float32)],
        ),
        compiler_params=pltpu.CompilerParams(
            dimension_semantics=("parallel", "arbitrary"),
            vmem_limit_bytes=_VMEM_LIMIT_BYTES,
        ),
        cost_estimate=cost,
    )(*operands)

    # Each per-slice partial already carries the 1/batch_size factor.
    return jnp.sum(partials)


def _reference(pred, target):
    """Plain-JAX reference matching the PyTorch module."""
    batch_size = pred.shape[1]
    w = jax.nn.softmax(target.astype(jnp.float32), axis=2)
    d = pred.astype(jnp.float32) - target.astype(jnp.float32)
    return jnp.sum(w * d * d) / batch_size


if __name__ == "__main__":
    key = jax.random.PRNGKey(0)
    k1, k2, k3, k4, k5, k6, k7, k8 = jax.random.split(key, 8)

    # (T, B, D) = (8, 2, 32): packed path (k = 4, 128 lanes fully used).
    pred = jax.random.normal(k1, (8, 2, 32), dtype=jnp.float32)
    target = jax.random.normal(k2, (8, 2, 32), dtype=jnp.float32)
    loss = jax.block_until_ready(rate_weighted_mse(pred, target))
    ref = jax.block_until_ready(_reference(pred, target))
    assert jnp.allclose(loss, ref, rtol=1e-4, atol=1e-5), (loss, ref)

    # Ragged row count + partial packing (rows = 15 -> k = 3, packed_D = 96).
    pred2 = jax.random.normal(k3, (5, 3, 32), dtype=jnp.float32)
    target2 = jax.random.normal(k4, (5, 3, 32), dtype=jnp.float32)
    loss2 = jax.block_until_ready(rate_weighted_mse(pred2, target2))
    ref2 = jax.block_until_ready(_reference(pred2, target2))
    assert jnp.allclose(loss2, ref2, rtol=1e-4, atol=1e-5), (loss2, ref2)

    # D = 128: un-packed lane-sum softmax path.
    pred3 = jax.random.normal(k5, (4, 2, 128), dtype=jnp.float32)
    target3 = jax.random.normal(k6, (4, 2, 128), dtype=jnp.float32)
    loss3 = jax.block_until_ready(rate_weighted_mse(pred3, target3))
    ref3 = jax.block_until_ready(_reference(pred3, target3))
    assert jnp.allclose(loss3, ref3, rtol=1e-4, atol=1e-5), (loss3, ref3)

    # Force several grid steps (tiny per-block budget) to exercise the
    # multi-tile accumulate / end-of-slice flush path.
    pred4 = jax.random.normal(k7, (64, 8, 32), dtype=jnp.float32)
    target4 = jax.random.normal(k8, (64, 8, 32), dtype=jnp.float32)
    loss4 = jax.block_until_ready(
        rate_weighted_mse(pred4, target4, block_bytes=16 * 1024))
    ref4 = jax.block_until_ready(_reference(pred4, target4))
    assert jnp.allclose(loss4, ref4, rtol=1e-4, atol=1e-5), (loss4, ref4)

    print("KERNEL_OK")
</pallas_src>

<mosaic_0001>
module attributes {stable_mosaic.version = 11 : i64} {
  func.func @_rwmse_kernel(%arg0: i32, %arg1: i32, %arg2: memref<128x128xf32, #tpu.memory_space<vmem>>, %arg3: memref<8x128xf32, #tpu.memory_space<vmem>>, %arg4: memref<8x128xf32, #tpu.memory_space<vmem>>, %arg5: memref<1x1xf32, #tpu.memory_space<smem>>, %arg6: memref<8x128xf32, #tpu.memory_space<vmem>>) attributes {dimension_semantics = [#tpu.dimension_semantics<parallel>, #tpu.dimension_semantics<arbitrary>], iteration_bounds = array<i64: 1, 1>, scalar_prefetch = 0 : i64, scratch_operands = 1 : i64, tpu.core_type = #tpu.core_type<tc>, window_params = [{pipeline_mode = #tpu.pipeline_mode<synchronous>, transform_indices = @transform_0, window_bounds = array<i64: 128, 128>}, {transform_indices = @transform_1, window_bounds = array<i64: 8, 128>}, {transform_indices = @transform_2, window_bounds = array<i64: 8, 128>}, {transform_indices = @transform_3, window_bounds = array<i64: 1, 1>}]} {
    %c0_i32 = arith.constant 0 : i32
    %0 = arith.cmpi eq, %arg1, %c0_i32 : i32
    %1 = arith.extui %0 : i1 to i32
    %c0_i32_0 = arith.constant 0 : i32
    %2 = arith.cmpi ne, %1, %c0_i32_0 : i32
    scf.if %2 {
      %cst_15 = arith.constant 0.000000e+00 : f32
      %34 = vector.broadcast %cst_15 : f32 to vector<8x128xf32>
      %c0_16 = arith.constant 0 : index
      %c0_17 = arith.constant 0 : index
      %35 = vector.load %arg6[%c0_16, %c0_17] : memref<8x128xf32, #tpu.memory_space<vmem>>, vector<8x128xf32>
      tpu.vector_store %arg6[%c0_16, %c0_17], %34 {strides = array<i32>} : memref<8x128xf32, #tpu.memory_space<vmem>>, vector<8x128xf32>,
    } else {
    }
    %c0 = arith.constant 0 : index
    %c0_1 = arith.constant 0 : index
    %3 = vector.load %arg4[%c0, %c0_1] : memref<8x128xf32, #tpu.memory_space<vmem>>, vector<8x128xf32>
    %c0_2 = arith.constant 0 : index
    %c0_3 = arith.constant 0 : index
    %4 = vector.load %arg3[%c0_2, %c0_3] : memref<8x128xf32, #tpu.memory_space<vmem>>, vector<8x128xf32>
    %cst = arith.constant dense<0xFF800000> : vector<8xf32>
    %5 = vector.multi_reduction <maximumf>, %3, %cst [1] : vector<8x128xf32> to vector<8xf32>
    %6 = vector.shape_cast %5 : vector<8xf32> to vector<8x1xf32>
    %7 = vector.broadcast %6 : vector<8x1xf32> to vector<8x128xf32>
    %8 = arith.subf %3, %7 : vector<8x128xf32>
    %9 = math.exp %8 : vector<8x128xf32>
    %c0_4 = arith.constant 0 : index
    %c0_5 = arith.constant 0 : index
    %10 = vector.load %arg2[%c0_4, %c0_5] : memref<128x128xf32, #tpu.memory_space<vmem>>, vector<128x128xf32>
    %cst_6 = arith.constant dense<0.000000e+00> : vector<8x128xf32>
    %11 = tpu.matmul %9, %10, %cst_6 {dimension_numbers = #tpu.dot_dimension_numbers<[1], [0], [0], [1], [0, 0, 1, 1], [], []>} : vector<8x128xf32>, vector<128x128xf32>, vector<8x128xf32> -> vector<8x128xf32>
    %12 = arith.subf %4, %3 : vector<8x128xf32>
    %13 = arith.mulf %12, %12 : vector<8x128xf32>
    %14 = arith.mulf %9, %13 : vector<8x128xf32>
    %15 = arith.divf %14, %11 : vector<8x128xf32>
    %c1_i32 = arith.constant 1 : i32
    %16 = arith.muli %arg0, %c1_i32 : i32
    %17 = arith.addi %16, %arg1 : i32
    %c8_i32 = arith.constant 8 : i32
    %18 = arith.muli %17, %c8_i32 : i32
    %19 = tpu.iota {dimensions = array<i32: 0>} : vector<8x128xi32>
    %20 = vector.broadcast %18 : i32 to vector<8x128xi32>
    %21 = arith.addi %19, %20 : vector<8x128xi32>
    %c4_i32 = arith.constant 4 : i32
    %22 = vector.broadcast %c4_i32 : i32 to vector<8x128xi32>
    %23 = arith.cmpi slt, %21, %22 : vector<8x128xi32>
    %cst_7 = arith.constant 0.000000e+00 : f32
    %24 = vector.broadcast %cst_7 : f32 to vector<8x128xf32>
    %25 = arith.select %23, %15, %24 : vector<8x128xi1>, vector<8x128xf32>
    %c0_8 = arith.constant 0 : index
    %c0_9 = arith.constant 0 : index
    %26 = vector.load %arg6[%c0_8, %c0_9] : memref<8x128xf32, #tpu.memory_space<vmem>>, vector<8x128xf32>
    %27 = vector.shape_cast %25 : vector<8x128xf32> to vector<1x8x128xf32>
    %cst_10 = arith.constant dense<0.000000e+00> : vector<8x128xf32>
    %28 = vector.multi_reduction <add>, %27, %cst_10 [0] : vector<1x8x128xf32> to vector<8x128xf32>
    %29 = arith.addf %26, %28 : vector<8x128xf32>
    %c0_11 = arith.constant 0 : index
    %c0_12 = arith.constant 0 : index
    %30 = vector.load %arg6[%c0_11, %c0_12] : memref<8x128xf32, #tpu.memory_space<vmem>>, vector<8x128xf32>
    tpu.vector_store %arg6[%c0_11, %c0_12], %29 {strides = array<i32>} : memref<8x128xf32, #tpu.memory_space<vmem>>, vector<8x128xf32>,
    %c0_i32_13 = arith.constant 0 : i32
    %31 = arith.cmpi eq, %arg1, %c0_i32_13 : i32
    %32 = arith.extui %31 : i1 to i32
    %c0_i32_14 = arith.constant 0 : i32
    %33 = arith.cmpi ne, %32, %c0_i32_14 : i32
    scf.if %33 {
      %c0_15 = arith.constant 0 : index
      %c0_16 = arith.constant 0 : index
      %34 = vector.load %arg6[%c0_15, %c0_16] : memref<8x128xf32, #tpu.memory_space<vmem>>, vector<8x128xf32>
      %35 = vector.shape_cast %34 : vector<8x128xf32> to vector<1x8x128xf32>
      %cst_17 = arith.constant dense<0.000000e+00> : vector<1xf32>
      %36 = vector.multi_reduction <add>, %35, %cst_17 [1, 2] : vector<1x8x128xf32> to vector<1xf32>
      %37 = vector.shape_cast %36 : vector<1xf32> to vector<1x1x1xf32>
      %38 = vector.extract %37[0, 0, 0] : f32 from vector<1x1x1xf32>
      %cst_18 = arith.constant 5.000000e-01 : f32
      %39 = arith.mulf %38, %cst_18 : f32
      %c0_19 = arith.constant 0 : index
      %c0_20 = arith.constant 0 : index
      %40 = memref.load %arg5[%c0_19, %c0_20] : memref<1x1xf32, #tpu.memory_space<smem>>
      memref.store %39, %arg5[%c0_19, %c0_20] : memref<1x1xf32, #tpu.memory_space<smem>>
    } else {
    }
    return
  }
  func.func @transform_0(%arg0: i32, %arg1: i32) -> (i32, i32) {
    %c0_i32 = arith.constant 0 : i32
    %c0_i32_0 = arith.constant 0 : i32
    %c0_i32_1 = arith.constant 0 : i32
    return %c0_i32, %c0_i32_0 : i32, i32
  }
  func.func @transform_1(%arg0: i32, %arg1: i32) -> (i32, i32) {
    %c1_i32 = arith.constant 1 : i32
    %0 = arith.muli %arg0, %c1_i32 : i32
    %1 = arith.addi %0, %arg1 : i32
    %c0_i32 = arith.constant 0 : i32
    %2 = arith.minsi %1, %c0_i32 : i32
    %c0_i32_0 = arith.constant 0 : i32
    %c0_i32_1 = arith.constant 0 : i32
    return %2, %c0_i32_0 : i32, i32
  }
  func.func @transform_2(%arg0: i32, %arg1: i32) -> (i32, i32) {
    %c1_i32 = arith.constant 1 : i32
    %0 = arith.muli %arg0, %c1_i32 : i32
    %1 = arith.addi %0, %arg1 : i32
    %c0_i32 = arith.constant 0 : i32
    %2 = arith.minsi %1, %c0_i32 : i32
    %c0_i32_0 = arith.constant 0 : i32
    %c0_i32_1 = arith.constant 0 : i32
    return %2, %c0_i32_0 : i32, i32
  }
  func.func @transform_3(%arg0: i32, %arg1: i32) -> (i32, i32) {
    %c0_i32 = arith.constant 0 : i32
    %c0_i32_0 = arith.constant 0 : i32
    return %arg0, %c0_i32 : i32, i32
  }
}

</mosaic_0001>

<llo_original>
// kernel: tpu_custom_call.1
$region0: #{tpu_custom_call.1}
  #allocation0 [shape = 'u32[]', space=smem, size = 0x4, offset = 0x4, fixed_abs, tag = 'smem constant byte address 0x4 - core index']
  #allocation1 [shape = 'u32[144,128]{1,0:T(1,128)}', space=vmem, size = 0x12000, scoped, tag = 'internal scratch']
  #allocation2 [shape = 'f32[8,128]{1,0:T(8,128)}', space=vmem, size = 0x1000, scoped, tag = 'scratch operand']
  %s0 = inlined_call_operand.hbm [shape: f32[128,128], index: 0, kind: input, shape index: {}]
  %s1 = inlined_call_operand.hbm [shape: f32[4,128], index: 1, kind: input, shape index: {}]
  %s2 = inlined_call_operand.hbm [shape: f32[4,128], index: 2, kind: input, shape index: {}]
  %s3 = inlined_call_operand.hbm [shape: f32[1,1], index: 3, kind: output, shape index: {}]
  %s4 = sld [smem:[#allocation0]]
  $region42: #{tpu_custom_call.1} parent=0
    _
  %s6 = ssub.s32 1, %s4
  %s7 = scalar_select 0, %s6, %s4
  $region1: #{tpu_custom_call.1} parent=0
    #allocation3 [shape = 'u8[65536]{0}', space=vmem, size = 0x10000, scoped, tag = 'input window, operand 0, single buffered']
    #allocation4 [shape = 's32[1]{0}', space=sflag, size = 0x4, scoped, tag = 'scoped memory for tpu_custom_call.1']
    #allocation5 [shape = 's32[1]{0}', space=sflag, size = 0x4, scoped, tag = 'scoped memory for tpu_custom_call.1']
    #allocation6 [shape = 'u8[4096]{0}', space=vmem, size = 0x1000, scoped, tag = 'input window, operand 1, single buffered']
    #allocation7 [shape = 's32[1]{0}', space=sflag, size = 0x4, scoped, tag = 'scoped memory for tpu_custom_call.1']
    #allocation8 [shape = 'u8[4096]{0}', space=vmem, size = 0x1000, scoped, tag = 'input window, operand 2, single buffered']
    #allocation9 [shape = 'u8[512]{0}', space=smem, size = 0x200, scoped, tag = 'output window, operand 0, single buffered']
    %8 = vsyncpa [#allocation4], 0
    %9 = vsyncpa [#allocation7], 0
    %10 = vsyncpa [#allocation5], 0
    // Predicated region
    $region2: #{tpu_custom_call.1} parent=1 // pred_check
      _
    $region3: #{tpu_custom_call.1} parent=1 // pred_check_branch
      %12 = sbr.rel (0) target = $region5
    $region4: #{tpu_custom_call.1} parent=1 // pred_region
      %s14 = ssub.s32 2048, 2048
      %15 = vsyncadd [#allocation4], %s14
      %s16 = sshll.u32 [#allocation3], 4
      %s17 = int_to_ptr.vmem [resolvable:$true] %s16
      %22 = dma.hbm_to_vmem [thread:$0]  %s0, 2048, %s17, [#allocation4], 128, 128, 8
    $region5: #{tpu_custom_call.1} parent=1 // pred_fallthru
      _
    // Predicated region
    $region6: #{tpu_custom_call.1} parent=1 // pred_check
      _
    $region7: #{tpu_custom_call.1} parent=1 // pred_check_branch
      %24 = sbr.rel (0) target = $region9
    $region8: #{tpu_custom_call.1} parent=1 // pred_region
      %s25 = sadd.s32 0, 0
      %p26 = scmp.lt.s32.totalorder %s25, 0
      %s27 = scalar_select %p26, %s25, 0
      %s28 = smul.u32 2, %s27
      %s29 = ssub.s32 1, %s28
      %s30 = smul.u32 64, %s29
      %s32 = ssub.s32 128, %s30
      %33 = vsyncadd [#allocation7], %s32
      %p34 = scmp.ne.s32.totalorder 0, %s30
      %s35 = smul.addr %s28, 64
      %s36 = scalar_lea.hbm %s1, %s35
      %s37 = smul.u32 4, %s29
      %s38 = sshll.u32 [#allocation6], 4
      %s39 = int_to_ptr.vmem [resolvable:$true] %s38
      %s40 = sshll.u32 %s37, 4
      %44 = dma.hbm_to_vmem [thread:$0]  (%p34), %s36, %s40, %s39, [#allocation7], 64, 64, 4
    $region9: #{tpu_custom_call.1} parent=1 // pred_fallthru
      _
    // Predicated region
    $region10: #{tpu_custom_call.1} parent=1 // pred_check
      _
    $region11: #{tpu_custom_call.1} parent=1 // pred_check_branch
      %46 = sbr.rel (0) target = $region13
    $region12: #{tpu_custom_call.1} parent=1 // pred_region
      %s47 = sadd.s32 0, 0
      %p48 = scmp.lt.s32.totalorder %s47, 0
      %s49 = scalar_select %p48, %s47, 0
      %s50 = smul.u32 2, %s49
      %s51 = ssub.s32 1, %s50
      %s52 = smul.u32 64, %s51
      %s54 = ssub.s32 128, %s52
      %55 = vsyncadd [#allocation7], %s54
      %p56 = scmp.ne.s32.totalorder 0, %s52
      %s57 = smul.addr %s50, 64
      %s58 = scalar_lea.hbm %s2, %s57
      %s59 = smul.u32 4, %s51
      %s60 = sshll.u32 [#allocation8], 4
      %s61 = int_to_ptr.vmem [resolvable:$true] %s60
      %s62 = sshll.u32 %s59, 4
      %66 = dma.hbm_to_vmem [thread:$0]  (%p56), %s58, %s62, %s61, [#allocation7], 64, 64, 4
    $region13: #{tpu_custom_call.1} parent=1 // pred_fallthru
      _
    // Predicated region
    $region14: #{tpu_custom_call.1} parent=1 // pred_check
      _
    $region15: #{tpu_custom_call.1} parent=1 // pred_check_branch
      %68 = sbr.rel (0) target = $region17
    $region16: #{tpu_custom_call.1} parent=1 // pred_region
      %69 = dma.done [#allocation4], 2048
    $region17: #{tpu_custom_call.1} parent=1 // pred_fallthru
      _
    // Predicated region
    $region18: #{tpu_custom_call.1} parent=1 // pred_check
      _
    $region19: #{tpu_custom_call.1} parent=1 // pred_check_branch
      %71 = sbr.rel (0) target = $region21
    $region20: #{tpu_custom_call.1} parent=1 // pred_region
      %72 = dma.done [#allocation7], 128
    $region21: #{tpu_custom_call.1} parent=1 // pred_fallthru
      _
    // Predicated region
    $region22: #{tpu_custom_call.1} parent=1 // pred_check
      _
    $region23: #{tpu_custom_call.1} parent=1 // pred_check_branch
      %74 = sbr.rel (0) target = $region25
    $region24: #{tpu_custom_call.1} parent=1 // pred_region
      %75 = dma.done [#allocation7], 128
    $region25: #{tpu_custom_call.1} parent=1 // pred_fallthru
      _
    %s76 = sadd.s32 0, 0
    %p77 = scmp.lt.s32.totalorder %s76, 0
    %s78 = scalar_select %p77, %s76, 0
    %s79 = smul.u32 2, %s78
    %s80 = ssub.s32 1, %s79
    %s81 = smul.u32 64, %s80
    %s82 = sadd.s32 0, 0
    %p83 = scmp.lt.s32.totalorder %s82, 0
    %s84 = scalar_select %p83, %s82, 0
    %s85 = smul.u32 2, %s84
    %s86 = ssub.s32 1, %s85
    %s87 = smul.u32 64, %s86
    %p88 = scmp.eq.s32.totalorder 0, 0
    // Predicated region
    $region26: #{tpu_custom_call.1} parent=1 // pred_check
      %p89 = pneg %p88
    $region27: #{tpu_custom_call.1} parent=1 // pred_check_branch
      %91 = sbr.rel (%p89) target = $region29
    $region28: #{tpu_custom_call.1} parent=1 // pred_region
      %92 = vst [vmem:[#allocation2] sm:$0xff] 0.0
    $region29: #{tpu_custom_call.1} parent=1 // pred_fallthru
      _
    %v93 = vld [vmem:[#allocation8] sm:$0xff]
    %v94 = vld [vmem:[#allocation6] sm:$0xff]
    %95 = vmax.xlane.f32.xlu0 %v93
    %v96 = vpop.xlane.xlu0 %95
    %v97 = vsub.f32 %v93, %v96
    %v98 = vmul.f32 %v97, 1.442695
    %v99 = vpow.pop %v98
    %v100 = vld [vmem:[#allocation3] sm:$0xff]
    %v101 = vld [vmem:[#allocation3 + $0x8] sm:$0xff]
    %v102 = vld [vmem:[#allocation3 + $0x10] sm:$0xff]
    %v103 = vld [vmem:[#allocation3 + $0x18] sm:$0xff]
    %v104 = vld [vmem:[#allocation3 + $0x20] sm:$0xff]
    %v105 = vld [vmem:[#allocation3 + $0x28] sm:$0xff]
    %v106 = vld [vmem:[#allocation3 + $0x30] sm:$0xff]
    %v107 = vld [vmem:[#allocation3 + $0x38] sm:$0xff]
    %v108 = vld [vmem:[#allocation3 + $0x40] sm:$0xff]
    %v109 = vld [vmem:[#allocation3 + $0x48] sm:$0xff]
    %v110 = vld [vmem:[#allocation3 + $0x50] sm:$0xff]
    %v111 = vld [vmem:[#allocation3 + $0x58] sm:$0xff]
    %v112 = vld [vmem:[#allocation3 + $0x60] sm:$0xff]
    %v113 = vld [vmem:[#allocation3 + $0x68] sm:$0xff]
    %v114 = vld [vmem:[#allocation3 + $0x70] sm:$0xff]
    %v115 = vld [vmem:[#allocation3 + $0x78] sm:$0xff]
    %116 = vmatprep.subr.mxu0 0.0
    %117 = vmatpush1.msra.mxu0 %v115
    %118 = vmatprep.subr.mxu0 0.0
    %119 = vmatpush1.msra.mxu0 %v114
    %120 = vmatprep.subr.mxu0 0.0
    %121 = vmatpush1.msra.mxu0 %v113
    %122 = vmatprep.subr.mxu0 0.0
    %123 = vmatpush1.msra.mxu0 %v112
    %124 = vmatprep.subr.mxu0 0.0
    %125 = vmatpush1.msra.mxu0 %v111
    %126 = vmatprep.subr.mxu0 0.0
    %127 = vmatpush1.msra.mxu0 %v110
    %128 = vmatprep.subr.mxu0 0.0
    %129 = vmatpush1.msra.mxu0 %v109
    %130 = vmatprep.subr.mxu0 0.0
    %131 = vmatpush1.msra.mxu0 %v108
    %132 = vmatprep.subr.mxu0 0.0
    %133 = vmatpush1.msra.mxu0 %v107
    %134 = vmatprep.subr.mxu0 0.0
    %135 = vmatpush1.msra.mxu0 %v106
    %136 = vmatprep.subr.mxu0 0.0
    %137 = vmatpush1.msra.mxu0 %v105
    %138 = vmatprep.subr.mxu0 0.0
    %139 = vmatpush1.msra.mxu0 %v104
    %140 = vmatprep.subr.mxu0 0.0
    %141 = vmatpush1.msra.mxu0 %v103
    %142 = vmatprep.subr.mxu0 0.0
    %143 = vmatpush1.msra.mxu0 %v102
    %144 = vmatprep.subr.mxu0 0.0
    %145 = vmatpush1.msra.mxu0 %v101
    %146 = vmatprep.subr.mxu0 0.0
    %147 = vmatpush1.msra.mxu0 %v100
    %148 = vmatprep.subr.mxu0 0.0
    %149 = vmatpush2.msra.mxu0 0.0
    %150 = vmatprep.subr.mxu0 0.0
    %151 = vmatpush2.msra.mxu0 0.0
    %152 = vmatprep.subr.mxu0 0.0
    %153 = vmatpush2.msra.mxu0 0.0
    %154 = vmatprep.subr.mxu0 0.0
    %155 = vmatpush2.msra.mxu0 0.0
    %156 = vmatprep.subr.mxu0 0.0
    %157 = vmatpush2.msra.mxu0 0.0
    %158 = vmatprep.subr.mxu0 0.0
    %159 = vmatpush2.msra.mxu0 0.0
    %160 = vmatprep.subr.mxu0 0.0
    %161 = vmatpush2.msra.mxu0 0.0
    %162 = vmatprep.subr.mxu0 0.0
    %163 = vmatpush2.msra.mxu0 0.0
    %164 = vmatprep.subr.mxu0 0.0
    %165 = vmatpush2.msra.mxu0 0.0
    %166 = vmatprep.subr.mxu0 0.0
    %167 = vmatpush2.msra.mxu0 0.0
    %168 = vmatprep.subr.mxu0 0.0
    %169 = vmatpush2.msra.mxu0 0.0
    %170 = vmatprep.subr.mxu0 0.0
    %171 = vmatpush2.msra.mxu0 0.0
    %172 = vmatprep.subr.mxu0 0.0
    %173 = vmatpush2.msra.mxu0 0.0
    %174 = vmatprep.subr.mxu0 0.0
    %175 = vmatpush2.msra.mxu0 0.0
    %176 = vmatprep.subr.mxu0 0.0
    %177 = vmatpush2.msra.mxu0 0.0
    %178 = vmatprep.subr.mxu0 0.0
    %179 = vmatpush2.msra.mxu0 0.0
    %180 = vmatprep.mubr.f32.mxu0 0.0
    %181 = vmatmul.mubr.f32.gmra.mxu0 %v99
    %v182 = vpop.f32.mrf.mxu0
    %v183 = vadd.f32 0.0, %v182
    %v184 = vpop.f32.mrf.mxu0
    %185 = vdwg.mxu0
    %v186 = vsub.f32 %v94, %v93
    %v187 = vmul.f32 %v186, %v186
    %v188 = vmul.f32 %v99, %v187
    %v189 = vrcp.pop %v183
    %v190 = vmul.f32 %v188, %v189
    %s191 = sadd.s32 0, 0
    %s192 = smul.u32 %s191, 8
    %v193 = vlaneseq
    %v194 = vshrl.u32 %v193, 7
    %v195 = vstv %s192
    %v196 = vadd.s32 %v194, %v195
    %vm197 = vcmp.lt.s32.totalorder %v196, 4
    %v198 = vsel %vm197, %v190, 0.0
    %v199 = vld [vmem:[#allocation2] sm:$0xff]
    %v200 = vadd.f32 %v198, 0.0
    %v201 = vadd.f32 %v199, %v200
    %202 = vst [vmem:[#allocation2] sm:$0xff] %v201
    // Predicated region
    $region30: #{tpu_custom_call.1} parent=1 // pred_check
      %p203 = pneg %p88
    $region31: #{tpu_custom_call.1} parent=1 // pred_check_branch
      %205 = sbr.rel (%p203) target = $region33
    $region32: #{tpu_custom_call.1} parent=1 // pred_region
      %v206 = vld [vmem:[#allocation2] sm:$0xff]
      %207 = vadd.xlane.f32.xlu0 %v206
      %v208 = vpop.xlane.xlu0 %207
      %v209 = vrot.slane %v208, 4
      %v210 = vadd.f32 %v208, %v209
      %v211 = vrot.slane %v210, 2
      %v212 = vadd.f32 %v210, %v211
      %v213 = vrot.slane %v212, 1
      %v214 = vadd.f32 %v212, %v213
      %s215 = vtos %v214
      %s216 = smul.f32 %s215, 0.5
      %s217 = scalar_lea.smem [#allocation9], 0
      %218 = sst [smem:[%s217]] %s216
    $region33: #{tpu_custom_call.1} parent=1 // pred_fallthru
      _
    // Predicated region
    $region34: #{tpu_custom_call.1} parent=1 // pred_check
      _
    $region35: #{tpu_custom_call.1} parent=1 // pred_check_branch
      %220 = sbr.rel (0) target = $region37
    $region36: #{tpu_custom_call.1} parent=1 // pred_region
      %s222 = ssub.s32 16, 16
      %223 = vsyncadd [#allocation5], %s222
      %226 = dma.smem_to_hbm [#allocation9], 16, %s3, [#allocation5]
    $region37: #{tpu_custom_call.1} parent=1 // pred_fallthru
      _
    // Predicated region
    $region38: #{tpu_custom_call.1} parent=1 // pred_check
      _
    $region39: #{tpu_custom_call.1} parent=1 // pred_check_branch
      %228 = sbr.rel (0) target = $region41
    $region40: #{tpu_custom_call.1} parent=1 // pred_region
      %229 = dma.done [#allocation5], 16
    $region41: #{tpu_custom_call.1} parent=1 // pred_fallthru
      _
    %230 = sfence
    %231 = vsyncpa [#allocation4], 1
    %232 = vsyncpa [#allocation7], 1
    %233 = vsyncpa [#allocation5], 1

</llo_original>
